<compile_context>
chip_gen: v5e
topology: v5e:2x2
jax: 0.10.0
libtpu: 0.0.40
codegen_flags: <defaults>
</compile_context>

<pallas_src>
import functools

import jax
import jax.numpy as jnp
from jax.experimental import pallas as pl
from jax.experimental.pallas import tpu as pltpu

_NORM_EPS = 1e-12            # torch.nn.functional.normalize default eps
_VMEM_TILE_BUDGET = 40 * 1024 * 1024   # buffer budget; fits v7x 64 MiB physical


def _sface_cosine_kernel(x_ref, w_ref, out_ref, xn_ref, *, scale):
    # x_ref:   (TB, D)   input rows (resident across the class-tile axis)
    # w_ref:   (TC, D)   class-weight rows for this class tile (streamed)
    # out_ref: (TB, TC)  s * cosine  (lane-dense, TC multiple of 128)
    # xn_ref:  (TB, D)   VMEM scratch: normalized x, already in the MXU dtype
    j = pl.program_id(1)

    # F.normalize(..., dim=1, eps=1e-12): v / max(||v||, eps) == v * rsqrt(max(||v||^2, eps^2)).
    # Hoisted: only recomputed when the batch tile changes (j == 0).
    @pl.when(j == 0)
    def _():
        x = x_ref[...].astype(jnp.float32)
        inv = jax.lax.rsqrt(
            jnp.maximum(jnp.sum(x * x, axis=-1, keepdims=True),
                        _NORM_EPS * _NORM_EPS))
        xn_ref[...] = (x * inv).astype(xn_ref.dtype)

    w = w_ref[...].astype(jnp.float32)
    w_inv = jax.lax.rsqrt(
        jnp.maximum(jnp.sum(w * w, axis=-1, keepdims=True),
                    _NORM_EPS * _NORM_EPS))
    w_n = (w * w_inv).astype(xn_ref.dtype)

    # cosine = x_n @ w_n.T -- consume the PyTorch (out_features, in_features)
    # weight layout directly (trans_b contraction; Mosaic feeds the MXU without
    # a host-side transpose). f32 accumulation regardless of operand dtype.
    # Note: default (non-HIGHEST) matmul precision; within test tolerance.
    cos = jax.lax.dot_general(
        xn_ref[...], w_n,
        dimension_numbers=(((1,), (1,)), ((), ())),
        preferred_element_type=jnp.float32)
    out_ref[...] = (cos * scale).astype(out_ref.dtype)


def _pick_tile(total, preferred, align):
    """Largest multiple of `align` <= preferred that divides `total`.

    Caller guarantees total % align == 0, so `align` is always a valid result.
    """
    t = min(total, max(preferred, align))
    t -= t % align
    while t > align:
        if total % t == 0:
            return t
        t -= align
    return align


def _choose_tiles(B, C, D, in_bytes, w_bytes, out_bytes, mxu_bytes,
                  tb_align, budget_bytes):
    """Pick (TB, TC) maximizing the batch tile under a VMEM buffer budget."""
    def need(tb, tc):
        # x / w / out blocks are double-buffered by the pipeline; the
        # normalized-x scratch is single-buffered.
        return (2 * (tb * D * in_bytes + tc * D * w_bytes + tb * tc * out_bytes)
                + tb * D * mxu_bytes)

    # Keep the batch resident across the class axis (minimizes the dominant
    # HBM cost: weight re-streaming), but keep >= 2 batch blocks so v7x's two
    # TensorCores both get work along the "parallel" axis.
    tb_pref = B // 2 if B >= 2 * tb_align else B
    tb = _pick_tile(B, tb_pref, tb_align)
    tc = _pick_tile(C, 1024, 128)
    # Shrink the class tile first (doesn't change weight traffic), then TB.
    while need(tb, tc) > budget_bytes and tc > 128:
        tc = _pick_tile(C, tc // 2, 128)
    while need(tb, tc) > budget_bytes and tb > tb_align:
        tb = _pick_tile(B, tb // 2, tb_align)
    return tb, tc, need(tb, tc)


def sface_cosine(x, weight, *, s, mxu_dtype=None):
    """Returns output = s * (normalize(x) @ normalize(weight).T), shape (B, C)."""
    B, D = x.shape
    C, D2 = weight.shape
    assert D2 == D
    # Lane/sublane-dense layout so the MXU and the store path run unmasked.
    assert D % 128 == 0, "in_features must be a multiple of 128 (pad upstream)"
    assert C % 128 == 0, "out_features must be a multiple of 128 (pad upstream)"
    assert B % 8 == 0, "batch must be a multiple of 8 (pad upstream)"

    in_dt = jnp.dtype(x.dtype)
    w_dt = jnp.dtype(weight.dtype)
    mxu_dt = in_dt if mxu_dtype is None else jnp.dtype(mxu_dtype)

    # Sublane packing for the batch tile: 8 rows (f32), 16 (bf16), 32 (int8).
    pack = 8 * max(1, 4 // in_dt.itemsize)
    tb_align = pack if B % pack == 0 else 8

    # TODO(synk): for very large D (>= ~4K) add a K grid axis over D (with an
    # f32 accumulator scratch) instead of letting full-D blocks shrink TB/TC.
    TB, TC, tile_bytes = _choose_tiles(
        B, C, D, in_dt.itemsize, w_dt.itemsize, in_dt.itemsize,
        mxu_dt.itemsize, tb_align, _VMEM_TILE_BUDGET)
    grid = (B // TB, C // TC)
    n_btiles = B // TB

    # Explicit scoped-VMEM limit: overrides v5e's 16 MiB default when tiles
    # grow, while staying within v7x's 64 MiB physical VMEM per TensorCore.
    vmem_limit = int(min(64 * 1024 * 1024,
                         max(32 * 1024 * 1024, tile_bytes * 5 // 4)))

    kernel = functools.partial(_sface_cosine_kernel, scale=float(s))

    # Honest advisory cost: the weight matrix is streamed once per batch tile.
    flops = 2 * B * C * D + 5 * (B * D + n_btiles * C * D)
    transcendentals = B + n_btiles * C
    bytes_accessed = (in_dt.itemsize * B * D
                      + w_dt.itemsize * n_btiles * C * D
                      + in_dt.itemsize * B * C)

    out = pl.pallas_call(
        kernel,
        out_shape=jax.ShapeDtypeStruct((B, C), x.dtype),
        grid_spec=pltpu.PrefetchScalarGridSpec(
            num_scalar_prefetch=0,
            grid=grid,
            in_specs=[
                pl.BlockSpec((TB, D), lambda i, j: (i, 0)),   # x (resident over j)
                pl.BlockSpec((TC, D), lambda i, j: (j, 0)),   # weight tile (streamed)
            ],
            out_specs=pl.BlockSpec((TB, TC), lambda i, j: (i, j)),
            scratch_shapes=[pltpu.VMEM((TB, D), mxu_dt)],     # normalized x
        ),
        compiler_params=pltpu.CompilerParams(
            dimension_semantics=("parallel", "arbitrary"),
            vmem_limit_bytes=vmem_limit,
        ),
        cost_estimate=pl.CostEstimate(
            flops=int(flops), transcendentals=int(transcendentals),
            bytes_accessed=int(bytes_accessed)),
    )(x, weight)
    return out


@functools.partial(jax.jit, static_argnames=("s", "k", "a", "b", "mxu_bf16"))
def sface_loss(x, weight, label, *, s=64.0, k=80.0, a=0.8, b=1.22,
               mxu_bf16=False):
    """Forward of SFaceLoss (device_id=None path).

    mxu_bf16=True casts the normalized matmul operands to bfloat16 (f32
    accumulation) for the MXU fast path; default keeps full input-dtype parity.
    """
    C = weight.shape[0]
    mxu_dtype = jnp.bfloat16 if mxu_bf16 else None
    output = sface_cosine(x, weight, s=s, mxu_dtype=mxu_dtype)
    output_f32 = output.astype(jnp.float32)

    label_i = label.astype(jnp.int32)

    # WyiX = sum_j one_hot * output  ==  gather of the target logit. O(B).
    WyiX = jnp.take_along_axis(output_f32, label_i[:, None], axis=1)[:, 0]

    # TODO(synk): the acos/sigmoid re-weighting below stays in plain JAX --
    # jnp.arccos has no guaranteed Mosaic lowering inside a Pallas TPU kernel,
    # and it is only O(B*C) elementwise work vs the O(B*C*D) fused above.
    # (Fusing the inter_loss partial reduction in-kernel with a polynomial
    # arccos approximation is a possible follow-up.)
    # Clamp: rounding (especially with bf16 MXU operands) can push |cos| > 1,
    # which would produce NaN from arccos.
    theta_yi = jnp.arccos(jnp.clip(WyiX / s, -1.0, 1.0))
    weight_yi = 1.0 / (1.0 + jnp.exp(-k * (theta_yi - a)))
    intra_loss = -weight_yi * WyiX

    one_hot = jax.nn.one_hot(label_i, C, dtype=jnp.float32)
    zero_hot = 1.0 - one_hot
    Wj = zero_hot * output_f32
    theta_j = jnp.arccos(jnp.clip(Wj / s, -1.0, 1.0))
    weight_j = 1.0 / (1.0 + jnp.exp(k * (theta_j - b)))
    inter_loss = jnp.sum(weight_j * Wj, axis=1)

    loss = intra_loss.mean() + inter_loss.mean()
    Wyi_s = WyiX / s
    Wj_s = Wj / s
    return (output, loss, intra_loss.mean(), inter_loss.mean(),
            Wyi_s.mean(), Wj_s.mean())


def sface_loss_ref(x, weight, label, *, s=64.0, k=80.0, a=0.8, b=1.22):
    """Pure-JAX reference mirroring the PyTorch forward exactly."""
    x_n = x / jnp.maximum(
        jnp.sqrt(jnp.sum(x * x, axis=1, keepdims=True)), _NORM_EPS)
    w_n = weight / jnp.maximum(
        jnp.sqrt(jnp.sum(weight * weight, axis=1, keepdims=True)), _NORM_EPS)
    cosine = jnp.dot(x_n, w_n.T, precision=jax.lax.Precision.HIGHEST)
    output = cosine * s
    one_hot = jax.nn.one_hot(label, weight.shape[0], dtype=jnp.float32)
    zero_hot = 1.0 - one_hot
    WyiX = jnp.sum(one_hot * output, axis=1)
    theta_yi = jnp.arccos(WyiX / s)
    weight_yi = 1.0 / (1.0 + jnp.exp(-k * (theta_yi - a)))
    intra_loss = -weight_yi * WyiX
    Wj = zero_hot * output
    theta_j = jnp.arccos(Wj / s)
    weight_j = 1.0 / (1.0 + jnp.exp(k * (theta_j - b)))
    inter_loss = jnp.sum(weight_j * Wj, axis=1)
    loss = intra_loss.mean() + inter_loss.mean()
    return (output, loss, intra_loss.mean(), inter_loss.mean(),
            (WyiX / s).mean(), (Wj / s).mean())


if __name__ == "__main__":
    key = jax.random.PRNGKey(0)
    B, D, C = 8, 128, 512            # batch, in_features, out_features
    s, k, a, b = 64.0, 80.0, 0.8, 1.22

    kx, kw, kl = jax.random.split(key, 3)
    x = jax.random.normal(kx, (B, D), dtype=jnp.float32)
    # xavier_uniform-style init for the (out_features, in_features) weight
    bound = 2.0 * (6.0 / (C + D)) ** 0.5
    weight = jax.random.uniform(kw, (C, D), dtype=jnp.float32,
                                minval=-bound, maxval=bound)
    label = jax.random.randint(kl, (B,), 0, C, dtype=jnp.int32)

    ref = sface_loss_ref(x, weight, label, s=s, k=k, a=a, b=b)
    names = ("output", "loss", "intra_loss", "inter_loss",
             "Wyi_s_mean", "Wj_s_mean")

    # 1) Default path: matmul operands kept in the input dtype (f32 parity).
    got = jax.block_until_ready(sface_loss(x, weight, label, s=s, k=k, a=a, b=b))
    for name, g, r in zip(names, got, ref):
        assert jnp.allclose(g, r, atol=3e-3, rtol=3e-3), (
            f"{name} mismatch: {g} vs {r}")

    # 2) bf16-operand MXU fast path (f32 accumulation) -- looser check on the
    #    logits; scalar outputs only checked for finiteness (steep sigmoid).
    got_bf16 = jax.block_until_ready(
        sface_loss(x, weight, label, s=s, k=k, a=a, b=b, mxu_bf16=True))
    assert jnp.allclose(got_bf16[0], ref[0], atol=0.25, rtol=2e-2), (
        "bf16-path output mismatch")
    assert all(bool(jnp.all(jnp.isfinite(v))) for v in got_bf16), (
        "bf16-path produced non-finite values")

    print("KERNEL_OK")
</pallas_src>

<mosaic_0001>
module attributes {stable_mosaic.version = 11 : i64} {
  func.func @_sface_cosine_kernel(%arg0: i32, %arg1: i32, %arg2: memref<8x128xf32, #tpu.memory_space<vmem>>, %arg3: memref<512x128xf32, #tpu.memory_space<vmem>>, %arg4: memref<8x512xf32, #tpu.memory_space<vmem>>, %arg5: memref<8x128xf32, #tpu.memory_space<vmem>>) attributes {dimension_semantics = [#tpu.dimension_semantics<parallel>, #tpu.dimension_semantics<arbitrary>], iteration_bounds = array<i64: 1, 1>, scalar_prefetch = 0 : i64, scratch_operands = 1 : i64, tpu.core_type = #tpu.core_type<tc>, window_params = [{transform_indices = @transform_0, window_bounds = array<i64: 8, 128>}, {transform_indices = @transform_1, window_bounds = array<i64: 512, 128>}, {transform_indices = @transform_2, window_bounds = array<i64: 8, 512>}]} {
    %c0_i32 = arith.constant 0 : i32
    %0 = arith.cmpi eq, %arg1, %c0_i32 : i32
    %1 = arith.extui %0 : i1 to i32
    %c0_i32_0 = arith.constant 0 : i32
    %2 = arith.cmpi ne, %1, %c0_i32_0 : i32
    scf.if %2 {
      %c0_9 = arith.constant 0 : index
      %c0_10 = arith.constant 0 : index
      %17 = vector.load %arg2[%c0_9, %c0_10] : memref<8x128xf32, #tpu.memory_space<vmem>>, vector<8x128xf32>
      %18 = arith.mulf %17, %17 : vector<8x128xf32>
      %cst_11 = arith.constant dense<0.000000e+00> : vector<8xf32>
      %19 = vector.multi_reduction <add>, %18, %cst_11 [1] : vector<8x128xf32> to vector<8xf32>
      %20 = vector.shape_cast %19 : vector<8xf32> to vector<8x1xf32>
      %cst_12 = arith.constant 1.000000e-24 : f32
      %21 = vector.broadcast %cst_12 : f32 to vector<8x1xf32>
      %22 = arith.maximumf %20, %21 : vector<8x1xf32>
      %23 = math.rsqrt %22 : vector<8x1xf32>
      %24 = vector.broadcast %23 : vector<8x1xf32> to vector<8x128xf32>
      %25 = arith.mulf %17, %24 : vector<8x128xf32>
      %c0_13 = arith.constant 0 : index
      %c0_14 = arith.constant 0 : index
      %26 = vector.load %arg5[%c0_13, %c0_14] : memref<8x128xf32, #tpu.memory_space<vmem>>, vector<8x128xf32>
      tpu.vector_store %arg5[%c0_13, %c0_14], %25 {strides = array<i32>} : memref<8x128xf32, #tpu.memory_space<vmem>>, vector<8x128xf32>,
    } else {
    }
    %c0 = arith.constant 0 : index
    %c0_1 = arith.constant 0 : index
    %3 = vector.load %arg3[%c0, %c0_1] : memref<512x128xf32, #tpu.memory_space<vmem>>, vector<512x128xf32>
    %4 = arith.mulf %3, %3 : vector<512x128xf32>
    %cst = arith.constant dense<0.000000e+00> : vector<512xf32>
    %5 = vector.multi_reduction <add>, %4, %cst [1] : vector<512x128xf32> to vector<512xf32>
    %6 = vector.shape_cast %5 : vector<512xf32> to vector<512x1xf32>
    %cst_2 = arith.constant 1.000000e-24 : f32
    %7 = vector.broadcast %cst_2 : f32 to vector<512x1xf32>
    %8 = arith.maximumf %6, %7 : vector<512x1xf32>
    %9 = math.rsqrt %8 : vector<512x1xf32>
    %10 = vector.broadcast %9 : vector<512x1xf32> to vector<512x128xf32>
    %11 = arith.mulf %3, %10 : vector<512x128xf32>
    %c0_3 = arith.constant 0 : index
    %c0_4 = arith.constant 0 : index
    %12 = vector.load %arg5[%c0_3, %c0_4] : memref<8x128xf32, #tpu.memory_space<vmem>>, vector<8x128xf32>
    %cst_5 = arith.constant dense<0.000000e+00> : vector<8x512xf32>
    %13 = tpu.matmul %12, %11, %cst_5 {dimension_numbers = #tpu.dot_dimension_numbers<[1], [1], [0], [0], [0, 0, 1, 0], [], []>} : vector<8x128xf32>, vector<512x128xf32>, vector<8x512xf32> -> vector<8x512xf32>
    %cst_6 = arith.constant 6.400000e+01 : f32
    %14 = vector.broadcast %cst_6 : f32 to vector<8x512xf32>
    %15 = arith.mulf %13, %14 : vector<8x512xf32>
    %c0_7 = arith.constant 0 : index
    %c0_8 = arith.constant 0 : index
    %16 = vector.load %arg4[%c0_7, %c0_8] : memref<8x512xf32, #tpu.memory_space<vmem>>, vector<8x512xf32>
    tpu.vector_store %arg4[%c0_7, %c0_8], %15 {strides = array<i32>} : memref<8x512xf32, #tpu.memory_space<vmem>>, vector<8x512xf32>,
    return
  }
  func.func @transform_0(%arg0: i32, %arg1: i32) -> (i32, i32) {
    %c0_i32 = arith.constant 0 : i32
    %c0_i32_0 = arith.constant 0 : i32
    return %arg0, %c0_i32 : i32, i32
  }
  func.func @transform_1(%arg0: i32, %arg1: i32) -> (i32, i32) {
    %c0_i32 = arith.constant 0 : i32
    %c0_i32_0 = arith.constant 0 : i32
    return %arg1, %c0_i32 : i32, i32
  }
  func.func @transform_2(%arg0: i32, %arg1: i32) -> (i32, i32) {
    %c0_i32 = arith.constant 0 : i32
    return %arg0, %arg1 : i32, i32
  }
}

</mosaic_0001>

<llo_original>
// kernel: sface_loss.1
$region0: #{sface_loss.1}
  #allocation0 [shape = 'u32[]', space=smem, size = 0x4, offset = 0x4, fixed_abs, tag = 'smem constant byte address 0x4 - core index']
  #allocation1 [shape = 'u32[72,128]{1,0:T(1,128)}', space=vmem, size = 0x9000, scoped, tag = 'internal scratch']
  #allocation2 [shape = 'f32[8,128]{1,0:T(8,128)}', space=vmem, size = 0x1000, scoped, tag = 'scratch operand']
  %s0 = inlined_call_operand.vmem [shape: f32[8,128], index: 0, kind: input, shape index: {}]
  %s1 = inlined_call_operand.hbm [shape: f32[512,128], index: 1, kind: input, shape index: {}]
  %s2 = inlined_call_operand.vmem [shape: f32[8,512], index: 2, kind: output, shape index: {}]
  %s3 = sld [smem:[#allocation0]]
  $region26: #{sface_loss.1} parent=0
    _
  %s5 = ssub.s32 1, %s3
  %s6 = scalar_select 0, %s5, %s3
  $region1: #{sface_loss.1} parent=0
    #allocation3 [shape = 'u8[262144]{0}', space=vmem, size = 0x40000, scoped, tag = 'input window, operand 1, single buffered']
    #allocation4 [shape = 's32[1]{0}', space=sflag, size = 0x4, scoped, tag = 'scoped memory for sface_loss.1']
    %7 = vsyncpa [#allocation4], 0
    // Predicated region
    $region2: #{sface_loss.1} parent=1 // pred_check
      _
    $region3: #{sface_loss.1} parent=1 // pred_check_branch
      %9 = sbr.rel (0) target = $region5
    $region4: #{sface_loss.1} parent=1 // pred_region
      _
    $region5: #{sface_loss.1} parent=1 // pred_fallthru
      _
    // Predicated region
    $region6: #{sface_loss.1} parent=1 // pred_check
      _
    $region7: #{sface_loss.1} parent=1 // pred_check_branch
      %11 = sbr.rel (0) target = $region9
    $region8: #{sface_loss.1} parent=1 // pred_region
      %13 = vsyncadd [#allocation4], 0
      %s14 = sshll.u32 %s1, 4
      %s15 = int_to_ptr.hbm [resolvable:$true] %s14
      %s16 = sshll.u32 [#allocation3], 4
      %s17 = int_to_ptr.vmem [resolvable:$true] %s16
      %22 = dma.hbm_to_vmem [thread:$0]  %s15, 8192, %s17, [#allocation4], 128, 128, 8
    $region9: #{sface_loss.1} parent=1 // pred_fallthru
      _
    // Predicated region
    $region10: #{sface_loss.1} parent=1 // pred_check
      _
    $region11: #{sface_loss.1} parent=1 // pred_check_branch
      %24 = sbr.rel (0) target = $region13
    $region12: #{sface_loss.1} parent=1 // pred_region
      %26 = dma.done [#allocation4], 8192
    $region13: #{sface_loss.1} parent=1 // pred_fallthru
      _
    %p27 = scmp.eq.s32.totalorder 0, 0
    // Predicated region
    $region14: #{sface_loss.1} parent=1 // pred_check
      %p28 = pneg %p27
    $region15: #{sface_loss.1} parent=1 // pred_check_branch
      %30 = sbr.rel (%p28) target = $region17
    $region16: #{sface_loss.1} parent=1 // pred_region
      %v31 = vld [vmem:[%s0] sm:$0xff]
      %v32 = vmul.f32 %v31, %v31
      %33 = vadd.xlane.f32.xlu0 %v32
      %v34 = vpop.xlane.xlu0 %33
      %v35 = vmax.f32 %v34, 1e-24
      %v36 = vrsqrt.pop %v35
      %v37 = vmul.f32 %v36, %v35
      %v38 = vmul.f32 %v37, %v36
      %v39 = vmul.f32 0.5, %v38
      %v40 = vsub.f32 1.5, %v39
      %v41 = vmul.f32 %v36, %v40
      %vm42 = vweird.f32 %v35
      %vm43 = vweird.f32 %v36
      %vm44 = vmor %vm42, %vm43
      %v45 = vsel %vm44, %v36, %v41
      %v46 = vmul.f32 %v31, %v45
      %47 = vst [vmem:[#allocation2] sm:$0xff] %v46
    $region17: #{sface_loss.1} parent=1 // pred_fallthru
      _
    %v48 = vld [vmem:[#allocation3] sm:$0xff]
    %v49 = vld [vmem:[#allocation3 + $0x8] sm:$0xff]
    %v50 = vld [vmem:[#allocation3 + $0x10] sm:$0xff]
    %v51 = vld [vmem:[#allocation3 + $0x18] sm:$0xff]
    %v52 = vld [vmem:[#allocation3 + $0x20] sm:$0xff]
    %v53 = vld [vmem:[#allocation3 + $0x28] sm:$0xff]
    %v54 = vld [vmem:[#allocation3 + $0x30] sm:$0xff]
    %v55 = vld [vmem:[#allocation3 + $0x38] sm:$0xff]
    %v56 = vld [vmem:[#allocation3 + $0x40] sm:$0xff]
    %v57 = vld [vmem:[#allocation3 + $0x48] sm:$0xff]
    %v58 = vld [vmem:[#allocation3 + $0x50] sm:$0xff]
    %v59 = vld [vmem:[#allocation3 + $0x58] sm:$0xff]
    %v60 = vld [vmem:[#allocation3 + $0x60] sm:$0xff]
    %v61 = vld [vmem:[#allocation3 + $0x68] sm:$0xff]
    %v62 = vld [vmem:[#allocation3 + $0x70] sm:$0xff]
    %v63 = vld [vmem:[#allocation3 + $0x78] sm:$0xff]
    %v64 = vld [vmem:[#allocation3 + $0x80] sm:$0xff]
    %v65 = vld [vmem:[#allocation3 + $0x88] sm:$0xff]
    %v66 = vld [vmem:[#allocation3 + $0x90] sm:$0xff]
    %v67 = vld [vmem:[#allocation3 + $0x98] sm:$0xff]
    %v68 = vld [vmem:[#allocation3 + $0xa0] sm:$0xff]
    %v69 = vld [vmem:[#allocation3 + $0xa8] sm:$0xff]
    %v70 = vld [vmem:[#allocation3 + $0xb0] sm:$0xff]
    %v71 = vld [vmem:[#allocation3 + $0xb8] sm:$0xff]
    %v72 = vld [vmem:[#allocation3 + $0xc0] sm:$0xff]
    %v73 = vld [vmem:[#allocation3 + $0xc8] sm:$0xff]
    %v74 = vld [vmem:[#allocation3 + $0xd0] sm:$0xff]
    %v75 = vld [vmem:[#allocation3 + $0xd8] sm:$0xff]
    %v76 = vld [vmem:[#allocation3 + $0xe0] sm:$0xff]
    %v77 = vld [vmem:[#allocation3 + $0xe8] sm:$0xff]
    %v78 = vld [vmem:[#allocation3 + $0xf0] sm:$0xff]
    %v79 = vld [vmem:[#allocation3 + $0xf8] sm:$0xff]
    %v80 = vld [vmem:[#allocation3 + $0x100] sm:$0xff]
    %v81 = vld [vmem:[#allocation3 + $0x108] sm:$0xff]
    %v82 = vld [vmem:[#allocation3 + $0x110] sm:$0xff]
    %v83 = vld [vmem:[#allocation3 + $0x118] sm:$0xff]
    %v84 = vld [vmem:[#allocation3 + $0x120] sm:$0xff]
    %v85 = vld [vmem:[#allocation3 + $0x128] sm:$0xff]
    %v86 = vld [vmem:[#allocation3 + $0x130] sm:$0xff]
    %v87 = vld [vmem:[#allocation3 + $0x138] sm:$0xff]
    %v88 = vld [vmem:[#allocation3 + $0x140] sm:$0xff]
    %v89 = vld [vmem:[#allocation3 + $0x148] sm:$0xff]
    %v90 = vld [vmem:[#allocation3 + $0x150] sm:$0xff]
    %v91 = vld [vmem:[#allocation3 + $0x158] sm:$0xff]
    %v92 = vld [vmem:[#allocation3 + $0x160] sm:$0xff]
    %v93 = vld [vmem:[#allocation3 + $0x168] sm:$0xff]
    %v94 = vld [vmem:[#allocation3 + $0x170] sm:$0xff]
    %v95 = vld [vmem:[#allocation3 + $0x178] sm:$0xff]
    %v96 = vld [vmem:[#allocation3 + $0x180] sm:$0xff]
    %v97 = vld [vmem:[#allocation3 + $0x188] sm:$0xff]
    %v98 = vld [vmem:[#allocation3 + $0x190] sm:$0xff]
    %v99 = vld [vmem:[#allocation3 + $0x198] sm:$0xff]
    %v100 = vld [vmem:[#allocation3 + $0x1a0] sm:$0xff]
    %v101 = vld [vmem:[#allocation3 + $0x1a8] sm:$0xff]
    %v102 = vld [vmem:[#allocation3 + $0x1b0] sm:$0xff]
    %v103 = vld [vmem:[#allocation3 + $0x1b8] sm:$0xff]
    %v104 = vld [vmem:[#allocation3 + $0x1c0] sm:$0xff]
    %v105 = vld [vmem:[#allocation3 + $0x1c8] sm:$0xff]
    %v106 = vld [vmem:[#allocation3 + $0x1d0] sm:$0xff]
    %v107 = vld [vmem:[#allocation3 + $0x1d8] sm:$0xff]
    %v108 = vld [vmem:[#allocation3 + $0x1e0] sm:$0xff]
    %v109 = vld [vmem:[#allocation3 + $0x1e8] sm:$0xff]
    %v110 = vld [vmem:[#allocation3 + $0x1f0] sm:$0xff]
    %v111 = vld [vmem:[#allocation3 + $0x1f8] sm:$0xff]
    %v112 = vmul.f32 %v48, %v48
    %v113 = vmul.f32 %v49, %v49
    %v114 = vmul.f32 %v50, %v50
    %v115 = vmul.f32 %v51, %v51
    %v116 = vmul.f32 %v52, %v52
    %v117 = vmul.f32 %v53, %v53
    %v118 = vmul.f32 %v54, %v54
    %v119 = vmul.f32 %v55, %v55
    %v120 = vmul.f32 %v56, %v56
    %v121 = vmul.f32 %v57, %v57
    %v122 = vmul.f32 %v58, %v58
    %v123 = vmul.f32 %v59, %v59
    %v124 = vmul.f32 %v60, %v60
    %v125 = vmul.f32 %v61, %v61
    %v126 = vmul.f32 %v62, %v62
    %v127 = vmul.f32 %v63, %v63
    %v128 = vmul.f32 %v64, %v64
    %v129 = vmul.f32 %v65, %v65
    %v130 = vmul.f32 %v66, %v66
    %v131 = vmul.f32 %v67, %v67
    %v132 = vmul.f32 %v68, %v68
    %v133 = vmul.f32 %v69, %v69
    %v134 = vmul.f32 %v70, %v70
    %v135 = vmul.f32 %v71, %v71
    %v136 = vmul.f32 %v72, %v72
    %v137 = vmul.f32 %v73, %v73
    %v138 = vmul.f32 %v74, %v74
    %v139 = vmul.f32 %v75, %v75
    %v140 = vmul.f32 %v76, %v76
    %v141 = vmul.f32 %v77, %v77
    %v142 = vmul.f32 %v78, %v78
    %v143 = vmul.f32 %v79, %v79
    %v144 = vmul.f32 %v80, %v80
    %v145 = vmul.f32 %v81, %v81
    %v146 = vmul.f32 %v82, %v82
    %v147 = vmul.f32 %v83, %v83
    %v148 = vmul.f32 %v84, %v84
    %v149 = vmul.f32 %v85, %v85
    %v150 = vmul.f32 %v86, %v86
    %v151 = vmul.f32 %v87, %v87
    %v152 = vmul.f32 %v88, %v88
    %v153 = vmul.f32 %v89, %v89
    %v154 = vmul.f32 %v90, %v90
    %v155 = vmul.f32 %v91, %v91
    %v156 = vmul.f32 %v92, %v92
    %v157 = vmul.f32 %v93, %v93
    %v158 = vmul.f32 %v94, %v94
    %v159 = vmul.f32 %v95, %v95
    %v160 = vmul.f32 %v96, %v96
    %v161 = vmul.f32 %v97, %v97
    %v162 = vmul.f32 %v98, %v98
    %v163 = vmul.f32 %v99, %v99
    %v164 = vmul.f32 %v100, %v100
    %v165 = vmul.f32 %v101, %v101
    %v166 = vmul.f32 %v102, %v102
    %v167 = vmul.f32 %v103, %v103
    %v168 = vmul.f32 %v104, %v104
    %v169 = vmul.f32 %v105, %v105
    %v170 = vmul.f32 %v106, %v106
    %v171 = vmul.f32 %v107, %v107
    %v172 = vmul.f32 %v108, %v108
    %v173 = vmul.f32 %v109, %v109
    %v174 = vmul.f32 %v110, %v110
    %v175 = vmul.f32 %v111, %v111
    %176 = vadd.xlane.f32.xlu0 %v112
    %v177 = vpop.xlane.xlu0 %176
    %178 = vadd.xlane.f32.xlu0 %v113
    %v179 = vpop.xlane.xlu0 %178
    %180 = vadd.xlane.f32.xlu0 %v114
    %v181 = vpop.xlane.xlu0 %180
    %182 = vadd.xlane.f32.xlu0 %v115
    %v183 = vpop.xlane.xlu0 %182
    %184 = vadd.xlane.f32.xlu0 %v116
    %v185 = vpop.xlane.xlu0 %184
    %186 = vadd.xlane.f32.xlu0 %v117
    %v187 = vpop.xlane.xlu0 %186
    %188 = vadd.xlane.f32.xlu0 %v118
    %v189 = vpop.xlane.xlu0 %188
    %190 = vadd.xlane.f32.xlu0 %v119
    %v191 = vpop.xlane.xlu0 %190
    %192 = vadd.xlane.f32.xlu0 %v120
    %v193 = vpop.xlane.xlu0 %192
    %194 = vadd.xlane.f32.xlu0 %v121
    %v195 = vpop.xlane.xlu0 %194
    %196 = vadd.xlane.f32.xlu0 %v122
    %v197 = vpop.xlane.xlu0 %196
    %198 = vadd.xlane.f32.xlu0 %v123
    %v199 = vpop.xlane.xlu0 %198
    %200 = vadd.xlane.f32.xlu0 %v124
    %v201 = vpop.xlane.xlu0 %200
    %202 = vadd.xlane.f32.xlu0 %v125
    %v203 = vpop.xlane.xlu0 %202
    %204 = vadd.xlane.f32.xlu0 %v126
    %v205 = vpop.xlane.xlu0 %204
    %206 = vadd.xlane.f32.xlu0 %v127
    %v207 = vpop.xlane.xlu0 %206
    %208 = vadd.xlane.f32.xlu0 %v128
    %v209 = vpop.xlane.xlu0 %208
    %210 = vadd.xlane.f32.xlu0 %v129
    %v211 = vpop.xlane.xlu0 %210
    %212 = vadd.xlane.f32.xlu0 %v130
    %v213 = vpop.xlane.xlu0 %212
    %214 = vadd.xlane.f32.xlu0 %v131
    %v215 = vpop.xlane.xlu0 %214
    %216 = vadd.xlane.f32.xlu0 %v132
    %v217 = vpop.xlane.xlu0 %216
    %218 = vadd.xlane.f32.xlu0 %v133
    %v219 = vpop.xlane.xlu0 %218
    %220 = vadd.xlane.f32.xlu0 %v134
    %v221 = vpop.xlane.xlu0 %220
    %222 = vadd.xlane.f32.xlu0 %v135
    %v223 = vpop.xlane.xlu0 %222
    %224 = vadd.xlane.f32.xlu0 %v136
    %v225 = vpop.xlane.xlu0 %224
    %226 = vadd.xlane.f32.xlu0 %v137
    %v227 = vpop.xlane.xlu0 %226
    %228 = vadd.xlane.f32.xlu0 %v138
    %v229 = vpop.xlane.xlu0 %228
    %230 = vadd.xlane.f32.xlu0 %v139
    %v231 = vpop.xlane.xlu0 %230
    %232 = vadd.xlane.f32.xlu0 %v140
    %v233 = vpop.xlane.xlu0 %232
    %234 = vadd.xlane.f32.xlu0 %v141
    %v235 = vpop.xlane.xlu0 %234
    %236 = vadd.xlane.f32.xlu0 %v142
    %v237 = vpop.xlane.xlu0 %236
    %238 = vadd.xlane.f32.xlu0 %v143
    %v239 = vpop.xlane.xlu0 %238
    %240 = vadd.xlane.f32.xlu0 %v144
    %v241 = vpop.xlane.xlu0 %240
    %242 = vadd.xlane.f32.xlu0 %v145
    %v243 = vpop.xlane.xlu0 %242
    %244 = vadd.xlane.f32.xlu0 %v146
    %v245 = vpop.xlane.xlu0 %244
    %246 = vadd.xlane.f32.xlu0 %v147
    %v247 = vpop.xlane.xlu0 %246
    %248 = vadd.xlane.f32.xlu0 %v148
    %v249 = vpop.xlane.xlu0 %248
    %250 = vadd.xlane.f32.xlu0 %v149
    %v251 = vpop.xlane.xlu0 %250
    %252 = vadd.xlane.f32.xlu0 %v150
    %v253 = vpop.xlane.xlu0 %252
    %254 = vadd.xlane.f32.xlu0 %v151
    %v255 = vpop.xlane.xlu0 %254
    %256 = vadd.xlane.f32.xlu0 %v152
    %v257 = vpop.xlane.xlu0 %256
    %258 = vadd.xlane.f32.xlu0 %v153
    %v259 = vpop.xlane.xlu0 %258
    %260 = vadd.xlane.f32.xlu0 %v154
    %v261 = vpop.xlane.xlu0 %260
    %262 = vadd.xlane.f32.xlu0 %v155
    %v263 = vpop.xlane.xlu0 %262
    %264 = vadd.xlane.f32.xlu0 %v156
    %v265 = vpop.xlane.xlu0 %264
    %266 = vadd.xlane.f32.xlu0 %v157
    %v267 = vpop.xlane.xlu0 %266
    %268 = vadd.xlane.f32.xlu0 %v158
    %v269 = vpop.xlane.xlu0 %268
    %270 = vadd.xlane.f32.xlu0 %v159
    %v271 = vpop.xlane.xlu0 %270
    %272 = vadd.xlane.f32.xlu0 %v160
    %v273 = vpop.xlane.xlu0 %272
    %274 = vadd.xlane.f32.xlu0 %v161
    %v275 = vpop.xlane.xlu0 %274
    %276 = vadd.xlane.f32.xlu0 %v162
    %v277 = vpop.xlane.xlu0 %276
    %278 = vadd.xlane.f32.xlu0 %v163
    %v279 = vpop.xlane.xlu0 %278
    %280 = vadd.xlane.f32.xlu0 %v164
    %v281 = vpop.xlane.xlu0 %280
    %282 = vadd.xlane.f32.xlu0 %v165
    %v283 = vpop.xlane.xlu0 %282
    %284 = vadd.xlane.f32.xlu0 %v166
    %v285 = vpop.xlane.xlu0 %284
    %286 = vadd.xlane.f32.xlu0 %v167
    %v287 = vpop.xlane.xlu0 %286
    %288 = vadd.xlane.f32.xlu0 %v168
    %v289 = vpop.xlane.xlu0 %288
    %290 = vadd.xlane.f32.xlu0 %v169
    %v291 = vpop.xlane.xlu0 %290
    %292 = vadd.xlane.f32.xlu0 %v170
    %v293 = vpop.xlane.xlu0 %292
    %294 = vadd.xlane.f32.xlu0 %v171
    %v295 = vpop.xlane.xlu0 %294
    %296 = vadd.xlane.f32.xlu0 %v172
    %v297 = vpop.xlane.xlu0 %296
    %298 = vadd.xlane.f32.xlu0 %v173
    %v299 = vpop.xlane.xlu0 %298
    %300 = vadd.xlane.f32.xlu0 %v174
    %v301 = vpop.xlane.xlu0 %300
    %302 = vadd.xlane.f32.xlu0 %v175
    %v303 = vpop.xlane.xlu0 %302
    %v304 = vmax.f32 %v177, 1e-24
    %v305 = vmax.f32 %v179, 1e-24
    %v306 = vmax.f32 %v181, 1e-24
    %v307 = vmax.f32 %v183, 1e-24
    %v308 = vmax.f32 %v185, 1e-24
    %v309 = vmax.f32 %v187, 1e-24
    %v310 = vmax.f32 %v189, 1e-24
    %v311 = vmax.f32 %v191, 1e-24
    %v312 = vmax.f32 %v193, 1e-24
    %v313 = vmax.f32 %v195, 1e-24
    %v314 = vmax.f32 %v197, 1e-24
    %v315 = vmax.f32 %v199, 1e-24
    %v316 = vmax.f32 %v201, 1e-24
    %v317 = vmax.f32 %v203, 1e-24
    %v318 = vmax.f32 %v205, 1e-24
    %v319 = vmax.f32 %v207, 1e-24
    %v320 = vmax.f32 %v209, 1e-24
    %v321 = vmax.f32 %v211, 1e-24
    %v322 = vmax.f32 %v213, 1e-24
    %v323 = vmax.f32 %v215, 1e-24
    %v324 = vmax.f32 %v217, 1e-24
    %v325 = vmax.f32 %v219, 1e-24
    %v326 = vmax.f32 %v221, 1e-24
    %v327 = vmax.f32 %v223, 1e-24
    %v328 = vmax.f32 %v225, 1e-24
    %v329 = vmax.f32 %v227, 1e-24
    %v330 = vmax.f32 %v229, 1e-24
    %v331 = vmax.f32 %v231, 1e-24
    %v332 = vmax.f32 %v233, 1e-24
    %v333 = vmax.f32 %v235, 1e-24
    %v334 = vmax.f32 %v237, 1e-24
    %v335 = vmax.f32 %v239, 1e-24
    %v336 = vmax.f32 %v241, 1e-24
    %v337 = vmax.f32 %v243, 1e-24
    %v338 = vmax.f32 %v245, 1e-24
    %v339 = vmax.f32 %v247, 1e-24
    %v340 = vmax.f32 %v249, 1e-24
    %v341 = vmax.f32 %v251, 1e-24
    %v342 = vmax.f32 %v253, 1e-24
    %v343 = vmax.f32 %v255, 1e-24
    %v344 = vmax.f32 %v257, 1e-24
    %v345 = vmax.f32 %v259, 1e-24
    %v346 = vmax.f32 %v261, 1e-24
    %v347 = vmax.f32 %v263, 1e-24
    %v348 = vmax.f32 %v265, 1e-24
    %v349 = vmax.f32 %v267, 1e-24
    %v350 = vmax.f32 %v269, 1e-24
    %v351 = vmax.f32 %v271, 1e-24
    %v352 = vmax.f32 %v273, 1e-24
    %v353 = vmax.f32 %v275, 1e-24
    %v354 = vmax.f32 %v277, 1e-24
    %v355 = vmax.f32 %v279, 1e-24
    %v356 = vmax.f32 %v281, 1e-24
    %v357 = vmax.f32 %v283, 1e-24
    %v358 = vmax.f32 %v285, 1e-24
    %v359 = vmax.f32 %v287, 1e-24
    %v360 = vmax.f32 %v289, 1e-24
    %v361 = vmax.f32 %v291, 1e-24
    %v362 = vmax.f32 %v293, 1e-24
    %v363 = vmax.f32 %v295, 1e-24
    %v364 = vmax.f32 %v297, 1e-24
    %v365 = vmax.f32 %v299, 1e-24
    %v366 = vmax.f32 %v301, 1e-24
    %v367 = vmax.f32 %v303, 1e-24
    %v368 = vrsqrt.pop %v304
    %v369 = vmul.f32 %v368, %v304
    %v370 = vmul.f32 %v369, %v368
    %v371 = vmul.f32 0.5, %v370
    %v372 = vsub.f32 1.5, %v371
    %v373 = vmul.f32 %v368, %v372
    %vm374 = vweird.f32 %v304
    %vm375 = vweird.f32 %v368
    %vm376 = vmor %vm374, %vm375
    %v377 = vsel %vm376, %v368, %v373
    %v378 = vrsqrt.pop %v305
    %v379 = vmul.f32 %v378, %v305
    %v380 = vmul.f32 %v379, %v378
    %v381 = vmul.f32 0.5, %v380
    %v382 = vsub.f32 1.5, %v381
    %v383 = vmul.f32 %v378, %v382
    %vm384 = vweird.f32 %v305
    %vm385 = vweird.f32 %v378
    %vm386 = vmor %vm384, %vm385
    %v387 = vsel %vm386, %v378, %v383
    %v388 = vrsqrt.pop %v306
    %v389 = vmul.f32 %v388, %v306
    %v390 = vmul.f32 %v389, %v388
    %v391 = vmul.f32 0.5, %v390
    %v392 = vsub.f32 1.5, %v391
    %v393 = vmul.f32 %v388, %v392
    %vm394 = vweird.f32 %v306
    %vm395 = vweird.f32 %v388
    %vm396 = vmor %vm394, %vm395
    %v397 = vsel %vm396, %v388, %v393
    %v398 = vrsqrt.pop %v307
    %v399 = vmul.f32 %v398, %v307
    %v400 = vmul.f32 %v399, %v398
    %v401 = vmul.f32 0.5, %v400
    %v402 = vsub.f32 1.5, %v401
    %v403 = vmul.f32 %v398, %v402
    %vm404 = vweird.f32 %v307
    %vm405 = vweird.f32 %v398
    %vm406 = vmor %vm404, %vm405
    %v407 = vsel %vm406, %v398, %v403
    %v408 = vrsqrt.pop %v308
    %v409 = vmul.f32 %v408, %v308
    %v410 = vmul.f32 %v409, %v408
    %v411 = vmul.f32 0.5, %v410
    %v412 = vsub.f32 1.5, %v411
    %v413 = vmul.f32 %v408, %v412
    %vm414 = vweird.f32 %v308
    %vm415 = vweird.f32 %v408
    %vm416 = vmor %vm414, %vm415
    %v417 = vsel %vm416, %v408, %v413
    %v418 = vrsqrt.pop %v309
    %v419 = vmul.f32 %v418, %v309
    %v420 = vmul.f32 %v419, %v418
    %v421 = vmul.f32 0.5, %v420
    %v422 = vsub.f32 1.5, %v421
    %v423 = vmul.f32 %v418, %v422
    %vm424 = vweird.f32 %v309
    %vm425 = vweird.f32 %v418
    %vm426 = vmor %vm424, %vm425
    %v427 = vsel %vm426, %v418, %v423
    %v428 = vrsqrt.pop %v310
    %v429 = vmul.f32 %v428, %v310
    %v430 = vmul.f32 %v429, %v428
    %v431 = vmul.f32 0.5, %v430
    %v432 = vsub.f32 1.5, %v431
    %v433 = vmul.f32 %v428, %v432
    %vm434 = vweird.f32 %v310
    %vm435 = vweird.f32 %v428
    %vm436 = vmor %vm434, %vm435
    %v437 = vsel %vm436, %v428, %v433
    %v438 = vrsqrt.pop %v311
    %v439 = vmul.f32 %v438, %v311
    %v440 = vmul.f32 %v439, %v438
    %v441 = vmul.f32 0.5, %v440
    %v442 = vsub.f32 1.5, %v441
    %v443 = vmul.f32 %v438, %v442
    %vm444 = vweird.f32 %v311
    %vm445 = vweird.f32 %v438
    %vm446 = vmor %vm444, %vm445
    %v447 = vsel %vm446, %v438, %v443
    %v448 = vrsqrt.pop %v312
    %v449 = vmul.f32 %v448, %v312
    %v450 = vmul.f32 %v449, %v448
    %v451 = vmul.f32 0.5, %v450
    %v452 = vsub.f32 1.5, %v451
    %v453 = vmul.f32 %v448, %v452
    %vm454 = vweird.f32 %v312
    %vm455 = vweird.f32 %v448
    %vm456 = vmor %vm454, %vm455
    %v457 = vsel %vm456, %v448, %v453
    %v458 = vrsqrt.pop %v313
    %v459 = vmul.f32 %v458, %v313
    %v460 = vmul.f32 %v459, %v458
    %v461 = vmul.f32 0.5, %v460
    %v462 = vsub.f32 1.5, %v461
    %v463 = vmul.f32 %v458, %v462
    %vm464 = vweird.f32 %v313
    %vm465 = vweird.f32 %v458
    %vm466 = vmor %vm464, %vm465
    %v467 = vsel %vm466, %v458, %v463
    %v468 = vrsqrt.pop %v314
    %v469 = vmul.f32 %v468, %v314
    %v470 = vmul.f32 %v469, %v468
    %v471 = vmul.f32 0.5, %v470
    %v472 = vsub.f32 1.5, %v471
    %v473 = vmul.f32 %v468, %v472
    %vm474 = vweird.f32 %v314
    %vm475 = vweird.f32 %v468
    %vm476 = vmor %vm474, %vm475
    %v477 = vsel %vm476, %v468, %v473
    %v478 = vrsqrt.pop %v315
    %v479 = vmul.f32 %v478, %v315
    %v480 = vmul.f32 %v479, %v478
    %v481 = vmul.f32 0.5, %v480
    %v482 = vsub.f32 1.5, %v481
    %v483 = vmul.f32 %v478, %v482
    %vm484 = vweird.f32 %v315
    %vm485 = vweird.f32 %v478
    %vm486 = vmor %vm484, %vm485
    %v487 = vsel %vm486, %v478, %v483
    %v488 = vrsqrt.pop %v316
    %v489 = vmul.f32 %v488, %v316
    %v490 = vmul.f32 %v489, %v488
    %v491 = vmul.f32 0.5, %v490
    %v492 = vsub.f32 1.5, %v491
    %v493 = vmul.f32 %v488, %v492
    %vm494 = vweird.f32 %v316
    %vm495 = vweird.f32 %v488
    %vm496 = vmor %vm494, %vm495
    %v497 = vsel %vm496, %v488, %v493
    %v498 = vrsqrt.pop %v317
    %v499 = vmul.f32 %v498, %v317
    %v500 = vmul.f32 %v499, %v498
    %v501 = vmul.f32 0.5, %v500
    %v502 = vsub.f32 1.5, %v501
    %v503 = vmul.f32 %v498, %v502
    %vm504 = vweird.f32 %v317
    %vm505 = vweird.f32 %v498
    %vm506 = vmor %vm504, %vm505
    %v507 = vsel %vm506, %v498, %v503
    %v508 = vrsqrt.pop %v318
    %v509 = vmul.f32 %v508, %v318
    %v510 = vmul.f32 %v509, %v508
    %v511 = vmul.f32 0.5, %v510
    %v512 = vsub.f32 1.5, %v511
    %v513 = vmul.f32 %v508, %v512
    %vm514 = vweird.f32 %v318
    %vm515 = vweird.f32 %v508
    %vm516 = vmor %vm514, %vm515
    %v517 = vsel %vm516, %v508, %v513
    %v518 = vrsqrt.pop %v319
    %v519 = vmul.f32 %v518, %v319
    %v520 = vmul.f32 %v519, %v518
    %v521 = vmul.f32 0.5, %v520
    %v522 = vsub.f32 1.5, %v521
    %v523 = vmul.f32 %v518, %v522
    %vm524 = vweird.f32 %v319
    %vm525 = vweird.f32 %v518
    %vm526 = vmor %vm524, %vm525
    %v527 = vsel %vm526, %v518, %v523
    %v528 = vrsqrt.pop %v320
    %v529 = vmul.f32 %v528, %v320
    %v530 = vmul.f32 %v529, %v528
    %v531 = vmul.f32 0.5, %v530
    %v532 = vsub.f32 1.5, %v531
    %v533 = vmul.f32 %v528, %v532
    %vm534 = vweird.f32 %v320
    %vm535 = vweird.f32 %v528
    %vm536 = vmor %vm534, %vm535
    %v537 = vsel %vm536, %v528, %v533
    %v538 = vrsqrt.pop %v321
    %v539 = vmul.f32 %v538, %v321
    %v540 = vmul.f32 %v539, %v538
    %v541 = vmul.f32 0.5, %v540
    %v542 = vsub.f32 1.5, %v541
    %v543 = vmul.f32 %v538, %v542
    %vm544 = vweird.f32 %v321
    %vm545 = vweird.f32 %v538
    %vm546 = vmor %vm544, %vm545
    %v547 = vsel %vm546, %v538, %v543
    %v548 = vrsqrt.pop %v322
    %v549 = vmul.f32 %v548, %v322
    %v550 = vmul.f32 %v549, %v548
    %v551 = vmul.f32 0.5, %v550
    %v552 = vsub.f32 1.5, %v551
    %v553 = vmul.f32 %v548, %v552
    %vm554 = vweird.f32 %v322
    %vm555 = vweird.f32 %v548
    %vm556 = vmor %vm554, %vm555
    %v557 = vsel %vm556, %v548, %v553
    %v558 = vrsqrt.pop %v323
    %v559 = vmul.f32 %v558, %v323
    %v560 = vmul.f32 %v559, %v558
    %v561 = vmul.f32 0.5, %v560
    %v562 = vsub.f32 1.5, %v561
    %v563 = vmul.f32 %v558, %v562
    %vm564 = vweird.f32 %v323
    %vm565 = vweird.f32 %v558
    %vm566 = vmor %vm564, %vm565
    %v567 = vsel %vm566, %v558, %v563
    %v568 = vrsqrt.pop %v324
    %v569 = vmul.f32 %v568, %v324
    %v570 = vmul.f32 %v569, %v568
    %v571 = vmul.f32 0.5, %v570
    %v572 = vsub.f32 1.5, %v571
    %v573 = vmul.f32 %v568, %v572
    %vm574 = vweird.f32 %v324
    %vm575 = vweird.f32 %v568
    %vm576 = vmor %vm574, %vm575
    %v577 = vsel %vm576, %v568, %v573
    %v578 = vrsqrt.pop %v325
    %v579 = vmul.f32 %v578, %v325
    %v580 = vmul.f32 %v579, %v578
    %v581 = vmul.f32 0.5, %v580
    %v582 = vsub.f32 1.5, %v581
    %v583 = vmul.f32 %v578, %v582
    %vm584 = vweird.f32 %v325
    %vm585 = vweird.f32 %v578
    %vm586 = vmor %vm584, %vm585
    %v587 = vsel %vm586, %v578, %v583
    %v588 = vrsqrt.pop %v326
    %v589 = vmul.f32 %v588, %v326
    %v590 = vmul.f32 %v589, %v588
    %v591 = vmul.f32 0.5, %v590
    %v592 = vsub.f32 1.5, %v591
    %v593 = vmul.f32 %v588, %v592
    %vm594 = vweird.f32 %v326
    %vm595 = vweird.f32 %v588
    %vm596 = vmor %vm594, %vm595
    %v597 = vsel %vm596, %v588, %v593
    %v598 = vrsqrt.pop %v327
    %v599 = vmul.f32 %v598, %v327
    %v600 = vmul.f32 %v599, %v598
    %v601 = vmul.f32 0.5, %v600
    %v602 = vsub.f32 1.5, %v601
    %v603 = vmul.f32 %v598, %v602
    %vm604 = vweird.f32 %v327
    %vm605 = vweird.f32 %v598
    %vm606 = vmor %vm604, %vm605
    %v607 = vsel %vm606, %v598, %v603
    %v608 = vrsqrt.pop %v328
    %v609 = vmul.f32 %v608, %v328
    %v610 = vmul.f32 %v609, %v608
    %v611 = vmul.f32 0.5, %v610
    %v612 = vsub.f32 1.5, %v611
    %v613 = vmul.f32 %v608, %v612
    %vm614 = vweird.f32 %v328
    %vm615 = vweird.f32 %v608
    %vm616 = vmor %vm614, %vm615
    %v617 = vsel %vm616, %v608, %v613
    %v618 = vrsqrt.pop %v329
    %v619 = vmul.f32 %v618, %v329
    %v620 = vmul.f32 %v619, %v618
    %v621 = vmul.f32 0.5, %v620
    %v622 = vsub.f32 1.5, %v621
    %v623 = vmul.f32 %v618, %v622
    %vm624 = vweird.f32 %v329
    %vm625 = vweird.f32 %v618
    %vm626 = vmor %vm624, %vm625
    %v627 = vsel %vm626, %v618, %v623
    %v628 = vrsqrt.pop %v330
    %v629 = vmul.f32 %v628, %v330
    %v630 = vmul.f32 %v629, %v628
    %v631 = vmul.f32 0.5, %v630
    %v632 = vsub.f32 1.5, %v631
    %v633 = vmul.f32 %v628, %v632
    %vm634 = vweird.f32 %v330
    %vm635 = vweird.f32 %v628
    %vm636 = vmor %vm634, %vm635
    %v637 = vsel %vm636, %v628, %v633
    %v638 = vrsqrt.pop %v331
    %v639 = vmul.f32 %v638, %v331
    %v640 = vmul.f32 %v639, %v638
    %v641 = vmul.f32 0.5, %v640
    %v642 = vsub.f32 1.5, %v641
    %v643 = vmul.f32 %v638, %v642
    %vm644 = vweird.f32 %v331
    %vm645 = vweird.f32 %v638
    %vm646 = vmor %vm644, %vm645
    %v647 = vsel %vm646, %v638, %v643
    %v648 = vrsqrt.pop %v332
    %v649 = vmul.f32 %v648, %v332
    %v650 = vmul.f32 %v649, %v648
    %v651 = vmul.f32 0.5, %v650
    %v652 = vsub.f32 1.5, %v651
    %v653 = vmul.f32 %v648, %v652
    %vm654 = vweird.f32 %v332
    %vm655 = vweird.f32 %v648
    %vm656 = vmor %vm654, %vm655
    %v657 = vsel %vm656, %v648, %v653
    %v658 = vrsqrt.pop %v333
    %v659 = vmul.f32 %v658, %v333
    %v660 = vmul.f32 %v659, %v658
    %v661 = vmul.f32 0.5, %v660
    %v662 = vsub.f32 1.5, %v661
    %v663 = vmul.f32 %v658, %v662
    %vm664 = vweird.f32 %v333
    %vm665 = vweird.f32 %v658
    %vm666 = vmor %vm664, %vm665
    %v667 = vsel %vm666, %v658, %v663
    %v668 = vrsqrt.pop %v334
    %v669 = vmul.f32 %v668, %v334
    %v670 = vmul.f32 %v669, %v668
    %v671 = vmul.f32 0.5, %v670
    %v672 = vsub.f32 1.5, %v671
    %v673 = vmul.f32 %v668, %v672
    %vm674 = vweird.f32 %v334
    %vm675 = vweird.f32 %v668
    %vm676 = vmor %vm674, %vm675
    %v677 = vsel %vm676, %v668, %v673
    %v678 = vrsqrt.pop %v335
    %v679 = vmul.f32 %v678, %v335
    %v680 = vmul.f32 %v679, %v678
    %v681 = vmul.f32 0.5, %v680
    %v682 = vsub.f32 1.5, %v681
    %v683 = vmul.f32 %v678, %v682
    %vm684 = vweird.f32 %v335
    %vm685 = vweird.f32 %v678
    %vm686 = vmor %vm684, %vm685
    %v687 = vsel %vm686, %v678, %v683
    %v688 = vrsqrt.pop %v336
    %v689 = vmul.f32 %v688, %v336
    %v690 = vmul.f32 %v689, %v688
    %v691 = vmul.f32 0.5, %v690
    %v692 = vsub.f32 1.5, %v691
    %v693 = vmul.f32 %v688, %v692
    %vm694 = vweird.f32 %v336
    %vm695 = vweird.f32 %v688
    %vm696 = vmor %vm694, %vm695
    %v697 = vsel %vm696, %v688, %v693
    %v698 = vrsqrt.pop %v337
    %v699 = vmul.f32 %v698, %v337
    %v700 = vmul.f32 %v699, %v698
    %v701 = vmul.f32 0.5, %v700
    %v702 = vsub.f32 1.5, %v701
    %v703 = vmul.f32 %v698, %v702
    %vm704 = vweird.f32 %v337
    %vm705 = vweird.f32 %v698
    %vm706 = vmor %vm704, %vm705
    %v707 = vsel %vm706, %v698, %v703
    %v708 = vrsqrt.pop %v338
    %v709 = vmul.f32 %v708, %v338
    %v710 = vmul.f32 %v709, %v708
    %v711 = vmul.f32 0.5, %v710
    %v712 = vsub.f32 1.5, %v711
    %v713 = vmul.f32 %v708, %v712
    %vm714 = vweird.f32 %v338
    %vm715 = vweird.f32 %v708
    %vm716 = vmor %vm714, %vm715
    %v717 = vsel %vm716, %v708, %v713
    %v718 = vrsqrt.pop %v339
    %v719 = vmul.f32 %v718, %v339
    %v720 = vmul.f32 %v719, %v718
    %v721 = vmul.f32 0.5, %v720
    %v722 = vsub.f32 1.5, %v721
    %v723 = vmul.f32 %v718, %v722
    %vm724 = vweird.f32 %v339
    %vm725 = vweird.f32 %v718
    %vm726 = vmor %vm724, %vm725
    %v727 = vsel %vm726, %v718, %v723
    %v728 = vrsqrt.pop %v340
    %v729 = vmul.f32 %v728, %v340
    %v730 = vmul.f32 %v729, %v728
    %v731 = vmul.f32 0.5, %v730
    %v732 = vsub.f32 1.5, %v731
    %v733 = vmul.f32 %v728, %v732
    %vm734 = vweird.f32 %v340
    %vm735 = vweird.f32 %v728
    %vm736 = vmor %vm734, %vm735
    %v737 = vsel %vm736, %v728, %v733
    %v738 = vrsqrt.pop %v341
    %v739 = vmul.f32 %v738, %v341
    %v740 = vmul.f32 %v739, %v738
    %v741 = vmul.f32 0.5, %v740
    %v742 = vsub.f32 1.5, %v741
    %v743 = vmul.f32 %v738, %v742
    %vm744 = vweird.f32 %v341
    %vm745 = vweird.f32 %v738
    %vm746 = vmor %vm744, %vm745
    %v747 = vsel %vm746, %v738, %v743
    %v748 = vrsqrt.pop %v342
    %v749 = vmul.f32 %v748, %v342
    %v750 = vmul.f32 %v749, %v748
    %v751 = vmul.f32 0.5, %v750
    %v752 = vsub.f32 1.5, %v751
    %v753 = vmul.f32 %v748, %v752
    %vm754 = vweird.f32 %v342
    %vm755 = vweird.f32 %v748
    %vm756 = vmor %vm754, %vm755
    %v757 = vsel %vm756, %v748, %v753
    %v758 = vrsqrt.pop %v343
    %v759 = vmul.f32 %v758, %v343
    %v760 = vmul.f32 %v759, %v758
    %v761 = vmul.f32 0.5, %v760
    %v762 = vsub.f32 1.5, %v761
    %v763 = vmul.f32 %v758, %v762
    %vm764 = vweird.f32 %v343
    %vm765 = vweird.f32 %v758
    %vm766 = vmor %vm764, %vm765
    %v767 = vsel %vm766, %v758, %v763
    %v768 = vrsqrt.pop %v344
    %v769 = vmul.f32 %v768, %v344
    %v770 = vmul.f32 %v769, %v768
    %v771 = vmul.f32 0.5, %v770
    %v772 = vsub.f32 1.5, %v771
    %v773 = vmul.f32 %v768, %v772
    %vm774 = vweird.f32 %v344
    %vm775 = vweird.f32 %v768
    %vm776 = vmor %vm774, %vm775
    %v777 = vsel %vm776, %v768, %v773
    %v778 = vrsqrt.pop %v345
    %v779 = vmul.f32 %v778, %v345
    %v780 = vmul.f32 %v779, %v778
    %v781 = vmul.f32 0.5, %v780
    %v782 = vsub.f32 1.5, %v781
    %v783 = vmul.f32 %v778, %v782
    %vm784 = vweird.f32 %v345
    %vm785 = vweird.f32 %v778
    %vm786 = vmor %vm784, %vm785
    %v787 = vsel %vm786, %v778, %v783
    %v788 = vrsqrt.pop %v346
    %v789 = vmul.f32 %v788, %v346
    %v790 = vmul.f32 %v789, %v788
    %v791 = vmul.f32 0.5, %v790
    %v792 = vsub.f32 1.5, %v791
    %v793 = vmul.f32 %v788, %v792
    %vm794 = vweird.f32 %v346
    %vm795 = vweird.f32 %v788
    %vm796 = vmor %vm794, %vm795
    %v797 = vsel %vm796, %v788, %v793
    %v798 = vrsqrt.pop %v347
    %v799 = vmul.f32 %v798, %v347
    %v800 = vmul.f32 %v799, %v798
    %v801 = vmul.f32 0.5, %v800
    %v802 = vsub.f32 1.5, %v801
    %v803 = vmul.f32 %v798, %v802
    %vm804 = vweird.f32 %v347
    %vm805 = vweird.f32 %v798
    %vm806 = vmor %vm804, %vm805
    %v807 = vsel %vm806, %v798, %v803
    %v808 = vrsqrt.pop %v348
    %v809 = vmul.f32 %v808, %v348
    %v810 = vmul.f32 %v809, %v808
    %v811 = vmul.f32 0.5, %v810
    %v812 = vsub.f32 1.5, %v811
    %v813 = vmul.f32 %v808, %v812
    %vm814 = vweird.f32 %v348
    %vm815 = vweird.f32 %v808
    %vm816 = vmor %vm814, %vm815
    %v817 = vsel %vm816, %v808, %v813
    %v818 = vrsqrt.pop %v349
    %v819 = vmul.f32 %v818, %v349
    %v820 = vmul.f32 %v819, %v818
    %v821 = vmul.f32 0.5, %v820
    %v822 = vsub.f32 1.5, %v821
    %v823 = vmul.f32 %v818, %v822
    %vm824 = vweird.f32 %v349
    %vm825 = vweird.f32 %v818
    %vm826 = vmor %vm824, %vm825
    %v827 = vsel %vm826, %v818, %v823
    %v828 = vrsqrt.pop %v350
    %v829 = vmul.f32 %v828, %v350
    %v830 = vmul.f32 %v829, %v828
    %v831 = vmul.f32 0.5, %v830
    %v832 = vsub.f32 1.5, %v831
    %v833 = vmul.f32 %v828, %v832
    %vm834 = vweird.f32 %v350
    %vm835 = vweird.f32 %v828
    %vm836 = vmor %vm834, %vm835
    %v837 = vsel %vm836, %v828, %v833
    %v838 = vrsqrt.pop %v351
    %v839 = vmul.f32 %v838, %v351
    %v840 = vmul.f32 %v839, %v838
    %v841 = vmul.f32 0.5, %v840
    %v842 = vsub.f32 1.5, %v841
    %v843 = vmul.f32 %v838, %v842
    %vm844 = vweird.f32 %v351
    %vm845 = vweird.f32 %v838
    %vm846 = vmor %vm844, %vm845
    %v847 = vsel %vm846, %v838, %v843
    %v848 = vrsqrt.pop %v352
    %v849 = vmul.f32 %v848, %v352
    %v850 = vmul.f32 %v849, %v848
    %v851 = vmul.f32 0.5, %v850
    %v852 = vsub.f32 1.5, %v851
    %v853 = vmul.f32 %v848, %v852
    %vm854 = vweird.f32 %v352
    %vm855 = vweird.f32 %v848
    %vm856 = vmor %vm854, %vm855
    %v857 = vsel %vm856, %v848, %v853
    %v858 = vrsqrt.pop %v353
    %v859 = vmul.f32 %v858, %v353
    %v860 = vmul.f32 %v859, %v858
    %v861 = vmul.f32 0.5, %v860
    %v862 = vsub.f32 1.5, %v861
    %v863 = vmul.f32 %v858, %v862
    %vm864 = vweird.f32 %v353
    %vm865 = vweird.f32 %v858
    %vm866 = vmor %vm864, %vm865
    %v867 = vsel %vm866, %v858, %v863
    %v868 = vrsqrt.pop %v354
    %v869 = vmul.f32 %v868, %v354
    %v870 = vmul.f32 %v869, %v868
    %v871 = vmul.f32 0.5, %v870
    %v872 = vsub.f32 1.5, %v871
    %v873 = vmul.f32 %v868, %v872
    %vm874 = vweird.f32 %v354
    %vm875 = vweird.f32 %v868
    %vm876 = vmor %vm874, %vm875
    %v877 = vsel %vm876, %v868, %v873
    %v878 = vrsqrt.pop %v355
    %v879 = vmul.f32 %v878, %v355
    %v880 = vmul.f32 %v879, %v878
    %v881 = vmul.f32 0.5, %v880
    %v882 = vsub.f32 1.5, %v881
    %v883 = vmul.f32 %v878, %v882
    %vm884 = vweird.f32 %v355
    %vm885 = vweird.f32 %v878
    %vm886 = vmor %vm884, %vm885
    %v887 = vsel %vm886, %v878, %v883
    %v888 = vrsqrt.pop %v356
    %v889 = vmul.f32 %v888, %v356
    %v890 = vmul.f32 %v889, %v888
    %v891 = vmul.f32 0.5, %v890
    %v892 = vsub.f32 1.5, %v891
    %v893 = vmul.f32 %v888, %v892
    %vm894 = vweird.f32 %v356
    %vm895 = vweird.f32 %v888
    %vm896 = vmor %vm894, %vm895
    %v897 = vsel %vm896, %v888, %v893
    %v898 = vrsqrt.pop %v357
    %v899 = vmul.f32 %v898, %v357
    %v900 = vmul.f32 %v899, %v898
    %v901 = vmul.f32 0.5, %v900
    %v902 = vsub.f32 1.5, %v901
    %v903 = vmul.f32 %v898, %v902
    %vm904 = vweird.f32 %v357
    %vm905 = vweird.f32 %v898
    %vm906 = vmor %vm904, %vm905
    %v907 = vsel %vm906, %v898, %v903
    %v908 = vrsqrt.pop %v358
    %v909 = vmul.f32 %v908, %v358
    %v910 = vmul.f32 %v909, %v908
    %v911 = vmul.f32 0.5, %v910
    %v912 = vsub.f32 1.5, %v911
    %v913 = vmul.f32 %v908, %v912
    %vm914 = vweird.f32 %v358
    %vm915 = vweird.f32 %v908
    %vm916 = vmor %vm914, %vm915
    %v917 = vsel %vm916, %v908, %v913
    %v918 = vrsqrt.pop %v359
    %v919 = vmul.f32 %v918, %v359
    %v920 = vmul.f32 %v919, %v918
    %v921 = vmul.f32 0.5, %v920
    %v922 = vsub.f32 1.5, %v921
    %v923 = vmul.f32 %v918, %v922
    %vm924 = vweird.f32 %v359
    %vm925 = vweird.f32 %v918
    %vm926 = vmor %vm924, %vm925
    %v927 = vsel %vm926, %v918, %v923
    %v928 = vrsqrt.pop %v360
    %v929 = vmul.f32 %v928, %v360
    %v930 = vmul.f32 %v929, %v928
    %v931 = vmul.f32 0.5, %v930
    %v932 = vsub.f32 1.5, %v931
    %v933 = vmul.f32 %v928, %v932
    %vm934 = vweird.f32 %v360
    %vm935 = vweird.f32 %v928
    %vm936 = vmor %vm934, %vm935
    %v937 = vsel %vm936, %v928, %v933
    %v938 = vrsqrt.pop %v361
    %v939 = vmul.f32 %v938, %v361
    %v940 = vmul.f32 %v939, %v938
    %v941 = vmul.f32 0.5, %v940
    %v942 = vsub.f32 1.5, %v941
    %v943 = vmul.f32 %v938, %v942
    %vm944 = vweird.f32 %v361
    %vm945 = vweird.f32 %v938
    %vm946 = vmor %vm944, %vm945
    %v947 = vsel %vm946, %v938, %v943
    %v948 = vrsqrt.pop %v362
    %v949 = vmul.f32 %v948, %v362
    %v950 = vmul.f32 %v949, %v948
    %v951 = vmul.f32 0.5, %v950
    %v952 = vsub.f32 1.5, %v951
    %v953 = vmul.f32 %v948, %v952
    %vm954 = vweird.f32 %v362
    %vm955 = vweird.f32 %v948
    %vm956 = vmor %vm954, %vm955
    %v957 = vsel %vm956, %v948, %v953
    %v958 = vrsqrt.pop %v363
    %v959 = vmul.f32 %v958, %v363
    %v960 = vmul.f32 %v959, %v958
    %v961 = vmul.f32 0.5, %v960
    %v962 = vsub.f32 1.5, %v961
    %v963 = vmul.f32 %v958, %v962
    %vm964 = vweird.f32 %v363
    %vm965 = vweird.f32 %v958
    %vm966 = vmor %vm964, %vm965
    %v967 = vsel %vm966, %v958, %v963
    %v968 = vrsqrt.pop %v364
    %v969 = vmul.f32 %v968, %v364
    %v970 = vmul.f32 %v969, %v968
    %v971 = vmul.f32 0.5, %v970
    %v972 = vsub.f32 1.5, %v971
    %v973 = vmul.f32 %v968, %v972
    %vm974 = vweird.f32 %v364
    %vm975 = vweird.f32 %v968
    %vm976 = vmor %vm974, %vm975
    %v977 = vsel %vm976, %v968, %v973
    %v978 = vrsqrt.pop %v365
    %v979 = vmul.f32 %v978, %v365
    %v980 = vmul.f32 %v979, %v978
    %v981 = vmul.f32 0.5, %v980
    %v982 = vsub.f32 1.5, %v981
    %v983 = vmul.f32 %v978, %v982
    %vm984 = vweird.f32 %v365
    %vm985 = vweird.f32 %v978
    %vm986 = vmor %vm984, %vm985
    %v987 = vsel %vm986, %v978, %v983
    %v988 = vrsqrt.pop %v366
    %v989 = vmul.f32 %v988, %v366
    %v990 = vmul.f32 %v989, %v988
    %v991 = vmul.f32 0.5, %v990
    %v992 = vsub.f32 1.5, %v991
    %v993 = vmul.f32 %v988, %v992
    %vm994 = vweird.f32 %v366
    %vm995 = vweird.f32 %v988
    %vm996 = vmor %vm994, %vm995
    %v997 = vsel %vm996, %v988, %v993
    %v998 = vrsqrt.pop %v367
    %v999 = vmul.f32 %v998, %v367
    %v1000 = vmul.f32 %v999, %v998
    %v1001 = vmul.f32 0.5, %v1000
    %v1002 = vsub.f32 1.5, %v1001
    %v1003 = vmul.f32 %v998, %v1002
    %vm1004 = vweird.f32 %v367
    %vm1005 = vweird.f32 %v998
    %vm1006 = vmor %vm1004, %vm1005
    %v1007 = vsel %vm1006, %v998, %v1003
    %v1008 = vmul.f32 %v48, %v377
    %v1009 = vmul.f32 %v49, %v387
    %v1010 = vmul.f32 %v50, %v397
    %v1011 = vmul.f32 %v51, %v407
    %v1012 = vmul.f32 %v52, %v417
    %v1013 = vmul.f32 %v53, %v427
    %v1014 = vmul.f32 %v54, %v437
    %v1015 = vmul.f32 %v55, %v447
    %v1016 = vmul.f32 %v56, %v457
    %v1017 = vmul.f32 %v57, %v467
    %v1018 = vmul.f32 %v58, %v477
    %v1019 = vmul.f32 %v59, %v487
    %v1020 = vmul.f32 %v60, %v497
    %v1021 = vmul.f32 %v61, %v507
    %v1022 = vmul.f32 %v62, %v517
    %v1023 = vmul.f32 %v63, %v527
    %v1024 = vmul.f32 %v64, %v537
    %v1025 = vmul.f32 %v65, %v547
    %v1026 = vmul.f32 %v66, %v557
    %v1027 = vmul.f32 %v67, %v567
    %v1028 = vmul.f32 %v68, %v577
    %v1029 = vmul.f32 %v69, %v587
    %v1030 = vmul.f32 %v70, %v597
    %v1031 = vmul.f32 %v71, %v607
    %v1032 = vmul.f32 %v72, %v617
    %v1033 = vmul.f32 %v73, %v627
    %v1034 = vmul.f32 %v74, %v637
    %v1035 = vmul.f32 %v75, %v647
    %v1036 = vmul.f32 %v76, %v657
    %v1037 = vmul.f32 %v77, %v667
    %v1038 = vmul.f32 %v78, %v677
    %v1039 = vmul.f32 %v79, %v687
    %v1040 = vmul.f32 %v80, %v697
    %v1041 = vmul.f32 %v81, %v707
    %v1042 = vmul.f32 %v82, %v717
    %v1043 = vmul.f32 %v83, %v727
    %v1044 = vmul.f32 %v84, %v737
    %v1045 = vmul.f32 %v85, %v747
    %v1046 = vmul.f32 %v86, %v757
    %v1047 = vmul.f32 %v87, %v767
    %v1048 = vmul.f32 %v88, %v777
    %v1049 = vmul.f32 %v89, %v787
    %v1050 = vmul.f32 %v90, %v797
    %v1051 = vmul.f32 %v91, %v807
    %v1052 = vmul.f32 %v92, %v817
    %v1053 = vmul.f32 %v93, %v827
    %v1054 = vmul.f32 %v94, %v837
    %v1055 = vmul.f32 %v95, %v847
    %v1056 = vmul.f32 %v96, %v857
    %v1057 = vmul.f32 %v97, %v867
    %v1058 = vmul.f32 %v98, %v877
    %v1059 = vmul.f32 %v99, %v887
    %v1060 = vmul.f32 %v100, %v897
    %v1061 = vmul.f32 %v101, %v907
    %v1062 = vmul.f32 %v102, %v917
    %v1063 = vmul.f32 %v103, %v927
    %v1064 = vmul.f32 %v104, %v937
    %v1065 = vmul.f32 %v105, %v947
    %v1066 = vmul.f32 %v106, %v957
    %v1067 = vmul.f32 %v107, %v967
    %v1068 = vmul.f32 %v108, %v977
    %v1069 = vmul.f32 %v109, %v987
    %v1070 = vmul.f32 %v110, %v997
    %v1071 = vmul.f32 %v111, %v1007
    %v1072 = vld [vmem:[#allocation2] sm:$0xff]
    %1073 = vmatpush.xpose.msra.mxu0 %v1023
    %1074 = vmatpush.xpose.msra.mxu0 %v1022
    %1075 = vmatpush.xpose.msra.mxu0 %v1021
    %1076 = vmatpush.xpose.msra.mxu0 %v1020
    %1077 = vmatpush.xpose.msra.mxu0 %v1019
    %1078 = vmatpush.xpose.msra.mxu0 %v1018
    %1079 = vmatpush.xpose.msra.mxu0 %v1017
    %1080 = vmatpush.xpose.msra.mxu0 %v1016
    %1081 = vmatpush.xpose.msra.mxu0 %v1015
    %1082 = vmatpush.xpose.msra.mxu0 %v1014
    %1083 = vmatpush.xpose.msra.mxu0 %v1013
    %1084 = vmatpush.xpose.msra.mxu0 %v1012
    %1085 = vmatpush.xpose.msra.mxu0 %v1011
    %1086 = vmatpush.xpose.msra.mxu0 %v1010
    %1087 = vmatpush.xpose.msra.mxu0 %v1009
    %1088 = vmatpush.xpose.msra.mxu0 %v1008
    %1089 = vmatmul.f32.gmra.mxu0 %v1072
    %v1090 = vpop.f32.mrf.mxu0
    %v1091 = vadd.f32 0.0, %v1090
    %1092 = vdwg.mxu0
    %1093 = vmatpush.xpose.msra.mxu0 %v1039
    %1094 = vmatpush.xpose.msra.mxu0 %v1038
    %1095 = vmatpush.xpose.msra.mxu0 %v1037
    %1096 = vmatpush.xpose.msra.mxu0 %v1036
    %1097 = vmatpush.xpose.msra.mxu0 %v1035
    %1098 = vmatpush.xpose.msra.mxu0 %v1034
    %1099 = vmatpush.xpose.msra.mxu0 %v1033
    %1100 = vmatpush.xpose.msra.mxu0 %v1032
    %1101 = vmatpush.xpose.msra.mxu0 %v1031
    %1102 = vmatpush.xpose.msra.mxu0 %v1030
    %1103 = vmatpush.xpose.msra.mxu0 %v1029
    %1104 = vmatpush.xpose.msra.mxu0 %v1028
    %1105 = vmatpush.xpose.msra.mxu0 %v1027
    %1106 = vmatpush.xpose.msra.mxu0 %v1026
    %1107 = vmatpush.xpose.msra.mxu0 %v1025
    %1108 = vmatpush.xpose.msra.mxu0 %v1024
    %1109 = vmatmul.f32.gmra.mxu0 %v1072
    %v1110 = vpop.f32.mrf.mxu0
    %v1111 = vadd.f32 0.0, %v1110
    %1112 = vdwg.mxu0
    %1113 = vmatpush.xpose.msra.mxu0 %v1055
    %1114 = vmatpush.xpose.msra.mxu0 %v1054
    %1115 = vmatpush.xpose.msra.mxu0 %v1053
    %1116 = vmatpush.xpose.msra.mxu0 %v1052
    %1117 = vmatpush.xpose.msra.mxu0 %v1051
    %1118 = vmatpush.xpose.msra.mxu0 %v1050
    %1119 = vmatpush.xpose.msra.mxu0 %v1049
    %1120 = vmatpush.xpose.msra.mxu0 %v1048
    %1121 = vmatpush.xpose.msra.mxu0 %v1047
    %1122 = vmatpush.xpose.msra.mxu0 %v1046
    %1123 = vmatpush.xpose.msra.mxu0 %v1045
    %1124 = vmatpush.xpose.msra.mxu0 %v1044
    %1125 = vmatpush.xpose.msra.mxu0 %v1043
    %1126 = vmatpush.xpose.msra.mxu0 %v1042
    %1127 = vmatpush.xpose.msra.mxu0 %v1041
    %1128 = vmatpush.xpose.msra.mxu0 %v1040
    %1129 = vmatmul.f32.gmra.mxu0 %v1072
    %v1130 = vpop.f32.mrf.mxu0
    %v1131 = vadd.f32 0.0, %v1130
    %1132 = vdwg.mxu0
    %1133 = vmatpush.xpose.msra.mxu0 %v1071
    %1134 = vmatpush.xpose.msra.mxu0 %v1070
    %1135 = vmatpush.xpose.msra.mxu0 %v1069
    %1136 = vmatpush.xpose.msra.mxu0 %v1068
    %1137 = vmatpush.xpose.msra.mxu0 %v1067
    %1138 = vmatpush.xpose.msra.mxu0 %v1066
    %1139 = vmatpush.xpose.msra.mxu0 %v1065
    %1140 = vmatpush.xpose.msra.mxu0 %v1064
    %1141 = vmatpush.xpose.msra.mxu0 %v1063
    %1142 = vmatpush.xpose.msra.mxu0 %v1062
    %1143 = vmatpush.xpose.msra.mxu0 %v1061
    %1144 = vmatpush.xpose.msra.mxu0 %v1060
    %1145 = vmatpush.xpose.msra.mxu0 %v1059
    %1146 = vmatpush.xpose.msra.mxu0 %v1058
    %1147 = vmatpush.xpose.msra.mxu0 %v1057
    %1148 = vmatpush.xpose.msra.mxu0 %v1056
    %1149 = vmatmul.f32.gmra.mxu0 %v1072
    %v1150 = vpop.f32.mrf.mxu0
    %v1151 = vadd.f32 0.0, %v1150
    %1152 = vdwg.mxu0
    %v1153 = vmul.f32 %v1091, 64.0
    %v1154 = vmul.f32 %v1111, 64.0
    %v1155 = vmul.f32 %v1131, 64.0
    %v1156 = vmul.f32 %v1151, 64.0
    %1157 = vst [vmem:[%s2] sm:$0xff] %v1153
    %1158 = vst [vmem:[%s2 + $0x8] sm:$0xff] %v1154
    %1159 = vst [vmem:[%s2 + $0x10] sm:$0xff] %v1155
    %1160 = vst [vmem:[%s2 + $0x18] sm:$0xff] %v1156
    // Predicated region
    $region18: #{sface_loss.1} parent=1 // pred_check
      _
    $region19: #{sface_loss.1} parent=1 // pred_check_branch
      %1162 = sbr.rel (0) target = $region21
    $region20: #{sface_loss.1} parent=1 // pred_region
      _
    $region21: #{sface_loss.1} parent=1 // pred_fallthru
      _
    // Predicated region
    $region22: #{sface_loss.1} parent=1 // pred_check
      _
    $region23: #{sface_loss.1} parent=1 // pred_check_branch
      %1164 = sbr.rel (0) target = $region25
    $region24: #{sface_loss.1} parent=1 // pred_region
      _
    $region25: #{sface_loss.1} parent=1 // pred_fallthru
      _
    %1165 = vsyncpa [#allocation4], 1

</llo_original>
